<compile_context>
chip_gen: v7x
topology: tpu7x:2x2x1
jax: 0.10.0
libtpu: 0.0.40
codegen_flags: <defaults>
</compile_context>

<pallas_src>
import numpy as np
from collections import defaultdict

import jax
import jax.numpy as jnp
from jax import lax
from jax.experimental import pallas as pl
from jax.experimental.pallas import tpu as pltpu

# TODO(synk): `value_len_config` is an undefined global in the reference code;
# use a constant max span length of 3 for every domain-slot pair.
value_len_config = defaultdict(lambda: 3)

VMEM = pltpu.MemorySpace.VMEM
NEG = -1e30
S_PAD = 8          # padded per-domain slot bucket (static across domains)
LSTM_UNROLL = 2    # unroll factor for the static-trip LSTM recurrences


def _vspecs(n):
    return [pl.BlockSpec(memory_space=VMEM) for _ in range(n)]


def _const_spec(a):
    """Full-array block that stays resident across all grid iterations."""
    return pl.BlockSpec(a.shape, lambda *_: (0,) * a.ndim)


# ----------------------------------------------------------------------------
# In-kernel helpers
# ----------------------------------------------------------------------------
def _mlp2v(x, w1, b1, w2, b2):
    h = jnp.tanh(jnp.dot(x, w1, preferred_element_type=jnp.float32) + b1)
    return jnp.dot(h, w2, preferred_element_type=jnp.float32) + b2


def _row_softmax_masked(logits, ncols_valid):
    col = lax.broadcasted_iota(jnp.int32, logits.shape, 1)
    lg = jnp.where(col < ncols_valid, logits, NEG)
    lg = lg - jnp.max(lg, axis=1, keepdims=True)
    e = jnp.exp(lg)
    return e * pl.reciprocal(jnp.sum(e, axis=1, keepdims=True), approx=True)


def _col_softmax_masked(logits, nrows_valid):
    row = lax.broadcasted_iota(jnp.int32, logits.shape, 0)
    lg = jnp.where(row < nrows_valid, logits, NEG)
    lg = lg - jnp.max(lg, axis=0, keepdims=True)
    e = jnp.exp(lg)
    return e * pl.reciprocal(jnp.sum(e, axis=0, keepdims=True), approx=True)


def _first_argmax(v, axis):
    """Index of the first maximum of a 2-D array whose other dim has size 1."""
    idx = lax.broadcasted_iota(jnp.int32, v.shape, axis)
    mx = jnp.max(v)
    return jnp.min(jnp.where(v >= mx, idx, v.shape[axis]))


def _lstm_gates(g, c_prev, H):
    i = jax.nn.sigmoid(g[:, 0:H])
    f = jax.nn.sigmoid(g[:, H:2 * H])
    gg = jnp.tanh(g[:, 2 * H:3 * H])
    o = jax.nn.sigmoid(g[:, 3 * H:4 * H])
    c = f * c_prev + i * gg
    h = o * jnp.tanh(c)
    return h, c


# ----------------------------------------------------------------------------
# Pallas kernels
# ----------------------------------------------------------------------------
def mlp2_kernel(x_ref, w1_ref, b1_ref, w2_ref, b2_ref, out_ref):
    """Linear -> Tanh -> Linear (domain encoder)."""
    out_ref[...] = _mlp2v(x_ref[...], w1_ref[...], b1_ref[...],
                          w2_ref[...], b2_ref[...])


def slot_encode_kernel(tok_ref, seg_ref, w1_ref, b1_ref, w2_ref, b2_ref, out_ref):
    """Slot encoder for ALL slots of ALL domains: MLP on stacked tokens, then
    segment-mean via a precomputed averaging matrix (padded slots -> zero)."""
    enc = _mlp2v(tok_ref[...], w1_ref[...], b1_ref[...], w2_ref[...], b2_ref[...])
    out_ref[...] = jnp.dot(seg_ref[...], enc, preferred_element_type=jnp.float32)


def utt_bilstm_kernel(lens_ref, x_ref, wih_f_ref, whh_f_ref, b_f_ref,
                      wih_b_ref, whh_b_ref, b_b_ref, out_ref, xpf_ref, xpb_ref):
    """Whole-batch BiLSTM.  x is time-major [Tp*B, ed]; forward & backward
    chains are interleaved in ONE static-trip-count loop (row-batched over
    examples), per-row masked by the valid length."""
    H = whh_f_ref.shape[0]
    B = lens_ref.shape[0]
    Tp = x_ref.shape[0] // B
    x = x_ref[...]
    xpf_ref[...] = jnp.dot(x, wih_f_ref[...],
                           preferred_element_type=jnp.float32) + b_f_ref[...]
    xpb_ref[...] = jnp.dot(x, wih_b_ref[...],
                           preferred_element_type=jnp.float32) + b_b_ref[...]
    lens_col = lens_ref[...]                                  # [B, 1] int32
    whh_f = whh_f_ref[...]
    whh_b = whh_b_ref[...]

    def step(k, carry):
        h_f, c_f, h_b, c_b = carry
        tb = Tp - 1 - k
        gf = xpf_ref[pl.ds(k * B, B), :] + jnp.dot(
            h_f, whh_f, preferred_element_type=jnp.float32)
        gb = xpb_ref[pl.ds(tb * B, B), :] + jnp.dot(
            h_b, whh_b, preferred_element_type=jnp.float32)
        h_f_n, c_f_n = _lstm_gates(gf, c_f, H)
        h_b_n, c_b_n = _lstm_gates(gb, c_b, H)
        vf = lens_col > k
        vb = lens_col > tb
        out_ref[pl.ds(k * B, B), pl.ds(0, H)] = jnp.where(vf, h_f_n, 0.0)
        out_ref[pl.ds(tb * B, B), pl.ds(H, H)] = jnp.where(vb, h_b_n, 0.0)
        return (jnp.where(vf, h_f_n, h_f), jnp.where(vf, c_f_n, c_f),
                jnp.where(vb, h_b_n, h_b), jnp.where(vb, c_b_n, c_b))

    z = jnp.zeros((B, H), jnp.float32)
    lax.fori_loop(0, Tp, step, (z, z, z, z), unroll=LSTM_UNROLL)


def decide_kernel(lens_ref, utt_ref, dom_ref, last_ref, slot_ref,
                  dwq_ref, dwr_ref, dw1a_ref, dw1b_ref, db1_ref, dw2_ref, db2_ref,
                  uw1_ref, ub1_ref, uw2_ref, ub2_ref,
                  sw1a_ref, sw1b_ref, sb1_ref, sw2_ref, sb2_ref,
                  vw1a_ref, vw1b_ref, vb1_ref, vw2_ref, vb2_ref,
                  dom_p_ref, slotsv_ref):
    """Fused per-example decision kernel (grid over examples):
       du-attention + domain scorer + softmax, and utt-summer + slot scorer +
       span-value scorer evaluated over EVERY domain's padded slot bank.  The
       host later selects the predicted domain's rows, so one launch and one
       host sync cover every decision of the batch."""
    b = pl.program_id(0)
    L = lens_ref[b]
    hd = dwq_ref.shape[1]
    utt = utt_ref[...]                 # [Tp, 2hd]
    dom = dom_ref[...]                 # [Dn, hd]

    # --- domain decision (concat in the reference -> row-split weights) ---
    q = jnp.maximum(jnp.dot(dom, dwq_ref[...],
                            preferred_element_type=jnp.float32), 0.0)
    r = jnp.maximum(jnp.dot(utt, dwr_ref[...],
                            preferred_element_type=jnp.float32), 0.0)
    logits = lax.dot_general(q, r, (((1,), (1,)), ((), ())),
                             preferred_element_type=jnp.float32) * (hd ** -0.5)
    scores = _row_softmax_masked(logits, L)
    att = jnp.dot(scores, utt, preferred_element_type=jnp.float32)       # [Dn, 2hd]
    h = jnp.tanh(jnp.dot(att, dw1a_ref[...], preferred_element_type=jnp.float32)
                 + jnp.dot(last_ref[...], dw1b_ref[...],
                           preferred_element_type=jnp.float32)
                 + db1_ref[...])
    dl = jnp.dot(h, dw2_ref[...], preferred_element_type=jnp.float32) + db2_ref[...]
    dl = dl - jnp.max(dl, axis=0, keepdims=True)
    e = jnp.exp(dl)
    dom_p_ref[...] = e * pl.reciprocal(jnp.sum(e, axis=0, keepdims=True), approx=True)

    # --- utterance summary (masked) ---
    ulog = _mlp2v(utt, uw1_ref[...], ub1_ref[...], uw2_ref[...], ub2_ref[...])
    s = _col_softmax_masked(ulog, L)
    usum = jnp.sum(s * utt, axis=0, keepdims=True)                        # [1, 2hd]

    # --- slot & span-value scorers over all Dn*S_PAD slot rows ---
    slot = slot_ref[...]                                                  # [Dn*S_PAD, hd]

    def scorer(w1a, w1b, b1, w2, b2):
        hh = jnp.tanh(jnp.dot(slot, w1a, preferred_element_type=jnp.float32)
                      + jnp.dot(usum, w1b, preferred_element_type=jnp.float32)
                      + b1)
        lg = jnp.dot(hh, w2, preferred_element_type=jnp.float32) + b2     # [*, 2]
        lg = lg - jnp.max(lg, axis=1, keepdims=True)
        ee = jnp.exp(lg)
        return ee * pl.reciprocal(jnp.sum(ee, axis=1, keepdims=True), approx=True)

    slot_p = scorer(sw1a_ref[...], sw1b_ref[...], sb1_ref[...],
                    sw2_ref[...], sb2_ref[...])
    sv_p = scorer(vw1a_ref[...], vw1b_ref[...], vb1_ref[...],
                  vw2_ref[...], vb2_ref[...])
    slotsv_ref[...] = jnp.concatenate([slot_p, sv_p], axis=1)             # [*, 4]


def span_kernel(meta_ref, utt_ref, ds_ref,
                wq_ref, wr_ref,
                wih_f_ref, whh_f_ref, b_f_ref,
                wih_b_ref, whh_b_ref, b_b_ref,
                mw1_ref, mb1_ref, mw2_ref, mb2_ref,
                pw1_ref, pb1_ref, pw2_ref, pb2_ref,
                cwih_ref, cwhh_ref, cb_ref,
                span_ref,
                enc_ref, xpf_ref, xpb_ref):
    """Whole pointer chain for one (example, span-value slot) entry of the
    batched grid: uu-attention -> uds BiLSTM (interleaved directions) ->
    summer -> pointer -> LSTMCell -> pointer -> banded-outer-product argmax,
    emitting only (start, end) int32."""
    i = pl.program_id(0)
    L = meta_ref[i, 1]
    vlen = meta_ref[i, 2]
    Tp, d2 = utt_ref.shape             # d2 = 2*hd
    H = wq_ref.shape[1]                # = hd

    utt = utt_ref[...]
    uds = jnp.concatenate(
        [jnp.broadcast_to(ds_ref[...], (Tp, d2)), utt], axis=1)          # [Tp, 4hd]

    # uu self-attention (eval-mode DotAttention), masked over valid tokens
    q = jnp.maximum(jnp.dot(uds, wq_ref[...],
                            preferred_element_type=jnp.float32), 0.0)
    r = jnp.maximum(jnp.dot(uds, wr_ref[...],
                            preferred_element_type=jnp.float32), 0.0)
    logits = lax.dot_general(q, r, (((1,), (1,)), ((), ())),
                             preferred_element_type=jnp.float32) * (H ** -0.5)
    scores = _row_softmax_masked(logits, L)
    uds_att = jnp.dot(scores, uds, preferred_element_type=jnp.float32)    # [Tp, 4hd]

    # uds BiLSTM: interleaved forward/backward chains, static trip count
    xpf_ref[...] = jnp.dot(uds_att, wih_f_ref[...],
                           preferred_element_type=jnp.float32) + b_f_ref[...]
    xpb_ref[...] = jnp.dot(uds_att, wih_b_ref[...],
                           preferred_element_type=jnp.float32) + b_b_ref[...]
    whh_f = whh_f_ref[...]
    whh_b = whh_b_ref[...]

    def step(k, carry):
        h_f, c_f, h_b, c_b = carry
        tb = Tp - 1 - k
        gf = xpf_ref[pl.ds(k, 1), :] + jnp.dot(
            h_f, whh_f, preferred_element_type=jnp.float32)
        gb = xpb_ref[pl.ds(tb, 1), :] + jnp.dot(
            h_b, whh_b, preferred_element_type=jnp.float32)
        h_f_n, c_f_n = _lstm_gates(gf, c_f, H)
        h_b_n, c_b_n = _lstm_gates(gb, c_b, H)
        vf = k < L
        vb = tb < L
        enc_ref[pl.ds(k, 1), pl.ds(0, H)] = jnp.where(vf, h_f_n, 0.0)
        enc_ref[pl.ds(tb, 1), pl.ds(H, H)] = jnp.where(vb, h_b_n, 0.0)
        return (jnp.where(vf, h_f_n, h_f), jnp.where(vf, c_f_n, c_f),
                jnp.where(vb, h_b_n, h_b), jnp.where(vb, c_b_n, c_b))

    z = jnp.zeros((1, H), jnp.float32)
    lax.fori_loop(0, Tp, step, (z, z, z, z), unroll=LSTM_UNROLL)
    enc = enc_ref[...]                                                    # [Tp, 2hd]

    # Summer -> initial pointer state
    slog = _mlp2v(enc, mw1_ref[...], mb1_ref[...], mw2_ref[...], mb2_ref[...])
    s0 = _col_softmax_masked(slog, L)
    init = jnp.sum(s0 * enc, axis=0, keepdims=True)                       # [1, 2hd]

    def pointer(state):
        match = jnp.concatenate(
            [jnp.broadcast_to(state, (Tp, d2)), enc], axis=1)             # [Tp, 4hd]
        lg = _mlp2v(match, pw1_ref[...], pb1_ref[...], pw2_ref[...], pb2_ref[...])
        s = _col_softmax_masked(lg, L)
        return s, jnp.sum(s * match, axis=0, keepdims=True)

    s1, start_vec = pointer(init)

    # LSTMCell step; the reference keeps the CELL state of rnn_cell(start, (init, init))
    g = (jnp.dot(start_vec, cwih_ref[...], preferred_element_type=jnp.float32)
         + jnp.dot(init, cwhh_ref[...], preferred_element_type=jnp.float32)
         + cb_ref[...])                                                   # [1, 8hd]
    D = d2
    ig = jax.nn.sigmoid(g[:, 0:D])
    fg = jax.nn.sigmoid(g[:, D:2 * D])
    gg = jnp.tanh(g[:, 2 * D:3 * D])
    state = fg * init + ig * gg                                           # cell state

    s2, _ = pointer(state)

    # banded outer-product span selection, on device, scalar (start, end) out
    outer = lax.dot_general(s1, s2, (((1,), (1,)), ((), ())),
                            preferred_element_type=jnp.float32)           # [Tp, Tp]
    ii = lax.broadcasted_iota(jnp.int32, (Tp, Tp), 0)
    jj = lax.broadcasted_iota(jnp.int32, (Tp, Tp), 1)
    band = (jj >= ii) & (jj <= ii + vlen) & (ii < L) & (jj < L)
    outer = jnp.where(band, outer, 0.0)
    start = _first_argmax(jnp.max(outer, axis=1, keepdims=True), axis=0)
    end = _first_argmax(jnp.max(outer, axis=0, keepdims=True), axis=1)
    lane = lax.broadcasted_iota(jnp.int32, (1, 2), 1)
    span_ref[...] = jnp.where(lane == 0, start, end).astype(jnp.int32)


# ----------------------------------------------------------------------------
# Jitted wrappers (cached per shape bucket)
# ----------------------------------------------------------------------------
@jax.jit
def mlp2(x, w1, b1, w2, b2):
    n, dout = x.shape[0], w2.shape[1]
    return pl.pallas_call(
        mlp2_kernel,
        out_shape=jax.ShapeDtypeStruct((n, dout), jnp.float32),
        in_specs=_vspecs(5),
        out_specs=pl.BlockSpec(memory_space=VMEM),
    )(x, w1, b1, w2, b2)


@jax.jit
def slot_encode(tok_emb, seg, w1, b1, w2, b2):
    ns, dout = seg.shape[0], w2.shape[1]
    return pl.pallas_call(
        slot_encode_kernel,
        out_shape=jax.ShapeDtypeStruct((ns, dout), jnp.float32),
        in_specs=_vspecs(6),
        out_specs=pl.BlockSpec(memory_space=VMEM),
    )(tok_emb, seg, w1, b1, w2, b2)


@jax.jit
def utt_bilstm(x_tb, lens_col, wih_f, whh_f, b_f, wih_b, whh_b, b_b):
    TpB, _ = x_tb.shape
    H = whh_f.shape[0]
    return pl.pallas_call(
        utt_bilstm_kernel,
        out_shape=jax.ShapeDtypeStruct((TpB, 2 * H), jnp.float32),
        in_specs=_vspecs(8),
        out_specs=pl.BlockSpec(memory_space=VMEM),
        scratch_shapes=[pltpu.VMEM((TpB, 4 * H), jnp.float32),
                        pltpu.VMEM((TpB, 4 * H), jnp.float32)],
    )(lens_col, x_tb, wih_f, whh_f, b_f, wih_b, whh_b, b_b)


@jax.jit
def decide_batch(lens, utt, dom_enc, last_rows, slot_all, weights):
    B, Tp, d2 = utt.shape
    Dn, hd_ = dom_enc.shape
    S_all = slot_all.shape[0]
    grid_spec = pltpu.PrefetchScalarGridSpec(
        num_scalar_prefetch=1,
        grid=(B,),
        in_specs=[
            pl.BlockSpec((None, Tp, d2), lambda b, ln: (b, 0, 0)),
            pl.BlockSpec((Dn, hd_), lambda b, ln: (0, 0)),
            pl.BlockSpec((None, 1, hd_), lambda b, ln: (b, 0, 0)),
            pl.BlockSpec((S_all, hd_), lambda b, ln: (0, 0)),
        ] + [_const_spec(w) for w in weights],
        out_specs=[
            pl.BlockSpec((None, Dn, 1), lambda b, ln: (b, 0, 0)),
            pl.BlockSpec((None, S_all, 4), lambda b, ln: (b, 0, 0)),
        ],
    )
    return pl.pallas_call(
        decide_kernel,
        out_shape=(jax.ShapeDtypeStruct((B, Dn, 1), jnp.float32),
                   jax.ShapeDtypeStruct((B, S_all, 4), jnp.float32)),
        grid_spec=grid_spec,
        compiler_params=pltpu.CompilerParams(dimension_semantics=("parallel",)),
    )(lens, utt, dom_enc, last_rows, slot_all, *weights)


@jax.jit
def span_batch(meta, utt, ds_rows, weights):
    N = ds_rows.shape[0]
    _, Tp, d2 = utt.shape
    hd_ = d2 // 2
    grid_spec = pltpu.PrefetchScalarGridSpec(
        num_scalar_prefetch=1,
        grid=(N,),
        in_specs=[
            pl.BlockSpec((None, Tp, d2), lambda i, m: (m[i, 0], 0, 0)),
            pl.BlockSpec((None, 1, d2), lambda i, m: (i, 0, 0)),
        ] + [_const_spec(w) for w in weights],
        out_specs=pl.BlockSpec((None, 1, 2), lambda i, m: (i, 0, 0)),
        scratch_shapes=[pltpu.VMEM((Tp, d2), jnp.float32),
                        pltpu.VMEM((Tp, 4 * hd_), jnp.float32),
                        pltpu.VMEM((Tp, 4 * hd_), jnp.float32)],
    )
    return pl.pallas_call(
        span_kernel,
        out_shape=jax.ShapeDtypeStruct((N, 1, 2), jnp.int32),
        grid_spec=grid_spec,
        compiler_params=pltpu.CompilerParams(dimension_semantics=("parallel",)),
    )(meta, utt, ds_rows, *weights)


# ----------------------------------------------------------------------------
# Parameter init (deterministic, synthetic)
# ----------------------------------------------------------------------------
def init_params(key, vocab_size, ed, hd):
    keys = iter(jax.random.split(key, 64))

    def nrm(shape, scale=0.1):
        return scale * jax.random.normal(next(keys), shape, dtype=jnp.float32)

    def mlp_p(din, dh, dout):
        return (nrm((din, dh)), nrm((1, dh)), nrm((dh, dout)), nrm((1, dout)))

    def lstm_p(din, h):        # gate-fused layout: [in, 4H], [H, 4H], [1, 4H]
        return {'wih_f': nrm((din, 4 * h)), 'whh_f': nrm((h, 4 * h)), 'b_f': nrm((1, 4 * h)),
                'wih_b': nrm((din, 4 * h)), 'whh_b': nrm((h, 4 * h)), 'b_b': nrm((1, 4 * h))}

    return {
        'emb': nrm((vocab_size, ed), 1.0),
        'domain_encoder': mlp_p(ed, hd, hd),
        'slot_encoder': mlp_p(ed, hd, hd),
        'utt_encoder': lstm_p(ed, hd),
        'du_attention': (nrm((hd, hd)), nrm((2 * hd, hd))),
        'domain_scorer': mlp_p(3 * hd, hd, 1),
        'utt_summer': mlp_p(2 * hd, hd, 1),
        'slot_scorer': mlp_p(3 * hd, hd, 2),
        'span_value_scorer': mlp_p(3 * hd, hd, 2),
        'uu_attention': (nrm((4 * hd, hd)), nrm((4 * hd, hd))),
        'uds_encoder': lstm_p(4 * hd, hd),
        'summer': mlp_p(2 * hd, hd, 1),
        'pointer': mlp_p(4 * hd, hd, 1),
        'pointer_lstm': (nrm((4 * hd, 8 * hd)), nrm((2 * hd, 8 * hd)), nrm((1, 8 * hd))),
    }


def build_weight_bundles(params, hd):
    """Concat-style layers of the reference become row-split weights here."""
    dwq, dwr = params['du_attention']
    dw1, db1, dw2, db2 = params['domain_scorer']
    uw1, ub1, uw2, ub2 = params['utt_summer']
    sw1, sb1, sw2, sb2 = params['slot_scorer']
    vw1, vb1, vw2, vb2 = params['span_value_scorer']
    decide_weights = (dwq, dwr, dw1[:2 * hd], dw1[2 * hd:], db1, dw2, db2,
                      uw1, ub1, uw2, ub2,
                      sw1[:hd], sw1[hd:], sb1, sw2, sb2,
                      vw1[:hd], vw1[hd:], vb1, vw2, vb2)

    uwq, uwr = params['uu_attention']
    ue = params['uds_encoder']
    mw1, mb1, mw2, mb2 = params['summer']
    pw1, pb1, pw2, pb2 = params['pointer']
    cwih, cwhh, cb = params['pointer_lstm']
    span_weights = (uwq, uwr,
                    ue['wih_f'], ue['whh_f'], ue['b_f'],
                    ue['wih_b'], ue['whh_b'], ue['b_b'],
                    mw1, mb1, mw2, mb2,
                    pw1, pb1, pw2, pb2,
                    cwih, cwhh, cb)
    return decide_weights, span_weights


# ----------------------------------------------------------------------------
# Tracker forward (eval mode: dropout disabled, no BCE loss terms accumulated)
# ----------------------------------------------------------------------------
def tracker_forward(params, args, ontology, vocab, batch):
    hd = args.hd
    emb = params['emb']
    B = len(batch)
    dev_outputs = []

    def get_emb(ids):
        return emb[jnp.asarray(ids, dtype=jnp.int32)]

    all_str_domains = ontology.domains
    all_numeric_domains = ontology.num['domains']
    Dn = len(all_numeric_domains)

    # ---- domain encodings (1 kernel) ----
    all_domain_enc = mlp2(get_emb(all_numeric_domains), *params['domain_encoder'])

    # ---- ALL slot encodings of ALL domains in one kernel (padded slot bank) ----
    flat_tok, seg_rows = [], []
    for di, d in enumerate(all_numeric_domains):
        slots = ontology.num[str(d)]
        assert len(slots) <= S_PAD
        for si, s in enumerate(slots):
            seg_rows.append((di * S_PAD + si, len(flat_tok), len(s)))
            flat_tok.extend(s)
    seg = np.zeros((Dn * S_PAD, len(flat_tok)), dtype=np.float32)
    for r, off, l in seg_rows:
        seg[r, off:off + l] = 1.0 / l
    slot_rows = slot_encode(get_emb(flat_tok), jnp.asarray(seg),
                            *params['slot_encoder'])        # [Dn*S_PAD, hd], pads = 0

    decide_weights, span_weights = build_weight_bundles(params, hd)

    # ---- batched, length-bucketed utterance BiLSTM (1 kernel for the batch) ----
    eos = vocab.word2index('<eos>')
    utterance_lens = [len(t.num['transcript']) for t in batch]
    Tp = max(8, -(-max(utterance_lens) // 8) * 8)
    ids_pad = np.full((B, Tp), eos, dtype=np.int32)
    for b, t in enumerate(batch):
        ids_pad[b, :len(t.num['transcript'])] = t.num['transcript']
    x_bte = emb[jnp.asarray(ids_pad)]                                    # [B, Tp, ed]
    x_tb = jnp.transpose(x_bte, (1, 0, 2)).reshape(Tp * B, -1)           # time-major
    lens_col = jnp.asarray(utterance_lens, jnp.int32).reshape(B, 1)
    u0 = params['utt_encoder']
    utt_flat = utt_bilstm(x_tb, lens_col, u0['wih_f'], u0['whh_f'], u0['b_f'],
                          u0['wih_b'], u0['whh_b'], u0['b_b'])           # [Tp*B, 2hd]
    batch_utt = utt_flat.reshape(Tp, B, 2 * hd).transpose(1, 0, 2)       # [B, Tp, 2hd]

    # ---- per-example "last domain" rows ----
    last_list = []
    for b in range(B):
        nd = batch[b].num.get('last_domain')
        if batch[b].last_domain == '' or nd not in all_numeric_domains:
            last_list.append(jnp.zeros((1, hd), jnp.float32))
        else:
            li = all_numeric_domains.index(nd)
            last_list.append(all_domain_enc[li:li + 1])
    last_rows = jnp.concatenate(last_list, axis=0).reshape(B, 1, hd)

    # ---- ALL domain / slot / span-value decisions: 1 kernel launch, 1 sync ----
    lens_arr = jnp.asarray(utterance_lens, jnp.int32)
    dom_p, slotsv = decide_batch(lens_arr, batch_utt, all_domain_enc, last_rows,
                                 slot_rows, decide_weights)
    dev_outputs.extend([dom_p, slotsv])
    dom_np = np.asarray(jax.device_get(dom_p))          # [B, Dn, 1]
    ssv_np = np.asarray(jax.device_get(slotsv))         # [B, Dn*S_PAD, 4]

    per_example = []
    entries = []   # (example, domain_idx, slot_idx, vlen)
    for b in range(B):
        pidx = int(np.argmax(dom_np[b, :, 0]))
        domain_str = all_str_domains[pidx]
        predicted_domain = all_numeric_domains[pidx]
        n_slots = len(ontology.num[str(predicted_domain)])
        rows = ssv_np[b, pidx * S_PAD:pidx * S_PAD + n_slots]
        slot_arg = np.argmax(rows[:, 0:2], axis=1)
        sv_arg = np.argmax(rows[:, 2:4], axis=1)
        mentioned = [i for i in range(n_slots) if slot_arg[i] == 1]
        sv_list = [i for i in mentioned if sv_arg[i] == 1]
        per_example.append({'pidx': pidx, 'domain': domain_str, 'n_slots': n_slots,
                            'mentioned': mentioned, 'sv_list': sv_list})
        slot_strs = ontology.domain_slots[domain_str]
        for slot_i in sv_list:
            vlen = value_len_config['{}-{}'.format(domain_str, slot_strs[slot_i])]
            entries.append((b, pidx, slot_i, vlen))

    # ---- all span-pointer chains of the batch: 1 kernel launch, 1 sync ----
    spans_np = None
    if entries:
        ex_idx = np.array([e[0] for e in entries], np.int32)
        d_idx = np.array([e[1] for e in entries], np.int32)
        s_idx = np.array([e[2] for e in entries], np.int32)
        vlens = np.array([e[3] for e in entries], np.int32)
        l_arr = np.array([utterance_lens[e[0]] for e in entries], np.int32)
        meta = jnp.asarray(np.stack([ex_idx, l_arr, vlens], axis=1))
        ds_rows = jnp.concatenate(
            [all_domain_enc[jnp.asarray(d_idx)],
             slot_rows[jnp.asarray(d_idx * S_PAD + s_idx)]],
            axis=1).reshape(len(entries), 1, 2 * hd)
        spans = span_batch(meta, batch_utt, ds_rows, span_weights)
        dev_outputs.append(spans)
        spans_np = np.asarray(jax.device_get(spans)).reshape(len(entries), 2)

    # ---- assemble predictions (host-side string glue, mirrors the reference) ----
    predictions = []
    e_ptr = 0
    for b in range(B):
        info = per_example[b]
        prediction = {'domain': info['domain']}
        slot_strs = ontology.domain_slots[info['domain']]
        n_slots = info['n_slots']
        if not info['mentioned']:
            prediction['slots'] = []
            predictions.append(prediction)
            continue
        predicted_values = -np.ones((n_slots, 2), dtype=np.int32)
        for i in range(n_slots):
            predicted_values[i, 1] = 1 if i in info['mentioned'] else 0
        for slot_i in info['sv_list']:
            predicted_values[slot_i] = spans_np[e_ptr]
            e_ptr += 1
        prediction['slots'] = []
        for i in range(n_slots):
            if predicted_values[i, 0] == -1 and predicted_values[i, 1] != -1:
                if predicted_values[i, 1] == 1:
                    prediction['slots'].append(
                        ('{}-{}'.format(info['domain'], slot_strs[i]), ''))
            elif predicted_values[i, 0] != -1 and predicted_values[i, 1] != -1:
                start, end = int(predicted_values[i, 0]), int(predicted_values[i, 1])
                prediction['slots'].append(
                    ('{}-{}'.format(info['domain'], slot_strs[i]),
                     ' '.join(batch[b].transcript[start:end + 1])))
        predictions.append(prediction)

    loss = 0.0   # eval mode: training BCE terms are not accumulated
    return loss, predictions, dev_outputs


# ----------------------------------------------------------------------------
# Synthetic ontology / vocab / batch
# ----------------------------------------------------------------------------
class Ontology:
    def __init__(self):
        self.domains = ['restaurant', 'hotel', 'taxi']
        self.num = {
            'domains': [5, 6, 7],
            '5': [[10, 11], [12, 13]],
            '6': [[14, 15], [16, 17], [18, 19]],
            '7': [[20, 21]],
        }
        self.domain_slots = {
            'restaurant': ['food', 'area'],
            'hotel': ['name', 'stars', 'area'],
            'taxi': ['destination'],
        }


class Vocab:
    def __init__(self, n):
        self._n = n

    def __len__(self):
        return self._n

    def word2index(self, w):
        return 1  # '<eos>'


class Turn:
    def __init__(self, transcript_ids, transcript_words):
        self.num = {'transcript': transcript_ids, 'last_domain': None}
        self.transcript = transcript_words
        self.last_domain = ''
        self.turn_label = []


class Args:
    def __init__(self):
        self.ed = 32
        self.hd = 32
        self.dropout = {'global': 0.2}
        self.gpu = None
        self.lr = 1e-3


# ----------------------------------------------------------------------------
if __name__ == "__main__":
    args = Args()
    ontology = Ontology()
    vocab = Vocab(50)

    key = jax.random.PRNGKey(0)
    params = init_params(key, len(vocab), args.ed, args.hd)

    batch = [
        Turn([3, 4, 5, 6, 7, 8, 9, 2],
             "i want a cheap restaurant in the north".split()),
        Turn([11, 12, 13, 14, 15, 2],
             "book a taxi to cambridge please".split()),
    ]

    loss, predictions, dev_outputs = tracker_forward(params, args, ontology, vocab, batch)

    # Smoke-test the span-pointer kernel even if the data-dependent decision
    # path selected no span-value slot for this synthetic batch.
    hd = args.hd
    _, span_weights = build_weight_bundles(params, hd)
    smoke_utt = 0.05 * jax.random.normal(jax.random.PRNGKey(1), (1, 8, 2 * hd), jnp.float32)
    smoke_ds = 0.05 * jax.random.normal(jax.random.PRNGKey(2), (1, 1, 2 * hd), jnp.float32)
    smoke_meta = jnp.asarray([[0, 8, 3]], dtype=jnp.int32)
    smoke_span = span_batch(smoke_meta, smoke_utt, smoke_ds, span_weights)
    dev_outputs.append(smoke_span)

    jax.block_until_ready(dev_outputs)
    print("KERNEL_OK")
</pallas_src>

<mosaic_0001>
module attributes {stable_mosaic.version = 11 : i64} {
  func.func @mlp2_kernel(%arg0: memref<3x32xf32, #tpu.memory_space<vmem>>, %arg1: memref<32x32xf32, #tpu.memory_space<vmem>>, %arg2: memref<1x32xf32, #tpu.memory_space<vmem>>, %arg3: memref<32x32xf32, #tpu.memory_space<vmem>>, %arg4: memref<1x32xf32, #tpu.memory_space<vmem>>, %arg5: memref<3x32xf32, #tpu.memory_space<vmem>>) attributes {dimension_semantics = [], scalar_prefetch = 0 : i64, scratch_operands = 0 : i64, tpu.core_type = #tpu.core_type<tc>} {
    %c0 = arith.constant 0 : index
    %c0_0 = arith.constant 0 : index
    %0 = vector.load %arg0[%c0, %c0_0] : memref<3x32xf32, #tpu.memory_space<vmem>>, vector<3x32xf32>
    %c0_1 = arith.constant 0 : index
    %c0_2 = arith.constant 0 : index
    %1 = vector.load %arg1[%c0_1, %c0_2] : memref<32x32xf32, #tpu.memory_space<vmem>>, vector<32x32xf32>
    %c0_3 = arith.constant 0 : index
    %c0_4 = arith.constant 0 : index
    %2 = vector.load %arg2[%c0_3, %c0_4] : memref<1x32xf32, #tpu.memory_space<vmem>>, vector<1x32xf32>
    %c0_5 = arith.constant 0 : index
    %c0_6 = arith.constant 0 : index
    %3 = vector.load %arg3[%c0_5, %c0_6] : memref<32x32xf32, #tpu.memory_space<vmem>>, vector<32x32xf32>
    %c0_7 = arith.constant 0 : index
    %c0_8 = arith.constant 0 : index
    %4 = vector.load %arg4[%c0_7, %c0_8] : memref<1x32xf32, #tpu.memory_space<vmem>>, vector<1x32xf32>
    %cst = arith.constant dense<0.000000e+00> : vector<3x32xf32>
    %5 = tpu.matmul %0, %1, %cst {dimension_numbers = #tpu.dot_dimension_numbers<[1], [0], [0], [1], [0, 0, 1, 1], [], []>} : vector<3x32xf32>, vector<32x32xf32>, vector<3x32xf32> -> vector<3x32xf32>
    %6 = vector.broadcast %2 : vector<1x32xf32> to vector<3x32xf32>
    %7 = arith.addf %5, %6 : vector<3x32xf32>
    %8 = math.tanh %7 : vector<3x32xf32>
    %cst_9 = arith.constant dense<0.000000e+00> : vector<3x32xf32>
    %9 = tpu.matmul %8, %3, %cst_9 {dimension_numbers = #tpu.dot_dimension_numbers<[1], [0], [0], [1], [0, 0, 1, 1], [], []>} : vector<3x32xf32>, vector<32x32xf32>, vector<3x32xf32> -> vector<3x32xf32>
    %10 = vector.broadcast %4 : vector<1x32xf32> to vector<3x32xf32>
    %11 = arith.addf %9, %10 : vector<3x32xf32>
    %c0_10 = arith.constant 0 : index
    %c0_11 = arith.constant 0 : index
    %12 = vector.load %arg5[%c0_10, %c0_11] : memref<3x32xf32, #tpu.memory_space<vmem>>, vector<3x32xf32>
    tpu.vector_store %arg5[%c0_10, %c0_11], %11 {strides = array<i32>} : memref<3x32xf32, #tpu.memory_space<vmem>>, vector<3x32xf32>,
    return
  }
}

</mosaic_0001>

<llo_original>
// kernel: mlp2.1
$region0: #{mlp2.1}
  #allocation0 [shape = 'u32[]', space=smem, size = 0x4, offset = 0x4, fixed_abs, tag = 'smem constant byte address 0x4 - core index']
  #allocation1 [shape = 'u32[144,128]{1,0:T(1,128)}', space=vmem, size = 0x12000, scoped, tag = 'internal scratch']
  %s0 = inlined_call_operand.hbm [shape: f32[3,32], index: 0, kind: input, shape index: {}]
  %s1 = inlined_call_operand.hbm [shape: f32[32,32], index: 1, kind: input, shape index: {}]
  %s2 = inlined_call_operand.vmem [shape: f32[1,32], index: 2, kind: input, shape index: {}]
  %s3 = inlined_call_operand.hbm [shape: f32[32,32], index: 3, kind: input, shape index: {}]
  %s4 = inlined_call_operand.vmem [shape: f32[1,32], index: 4, kind: input, shape index: {}]
  %s5 = inlined_call_operand.hbm [shape: f32[3,32], index: 5, kind: output, shape index: {}]
  %s6 = sld [smem:[#allocation0]]
  $region42: #{mlp2.1} parent=0
    _
  %s8 = ssub.s32 1, %s6
  %s9 = scalar_select 0, %s8, %s6
  $region1: #{mlp2.1} parent=0
    #allocation2 [shape = 'u8[2048]{0}', space=vmem, size = 0x800, scoped, tag = 'input window, operand 0, single buffered']
    #allocation3 [shape = 's32[1]{0}', space=sflag, size = 0x4, scoped, tag = 'scoped memory for mlp2.1']
    #allocation4 [shape = 's32[1]{0}', space=sflag, size = 0x4, scoped, tag = 'scoped memory for mlp2.1']
    #allocation5 [shape = 'u8[16384]{0}', space=vmem, size = 0x4000, scoped, tag = 'input window, operand 1, single buffered']
    #allocation6 [shape = 's32[1]{0}', space=sflag, size = 0x4, scoped, tag = 'scoped memory for mlp2.1']
    #allocation7 [shape = 'u8[16384]{0}', space=vmem, size = 0x4000, scoped, tag = 'input window, operand 3, single buffered']
    #allocation8 [shape = 'u8[2048]{0}', space=vmem, size = 0x800, scoped, tag = 'output window, operand 0, single buffered']
    %10 = vsyncpa [#allocation3], 0
    %11 = vsyncpa [#allocation6], 0
    %12 = vsyncpa [#allocation4], 0
    // Predicated region
    $region2: #{mlp2.1} parent=1 // pred_check
      _
    $region3: #{mlp2.1} parent=1 // pred_check_branch
      %14 = sbr.rel (0) target = $region5
    $region4: #{mlp2.1} parent=1 // pred_region
      %s16 = ssub.s32 64, 64
      %17 = vsyncadd [#allocation3], %s16
      %s19 = sshll.u32 [#allocation2], 4
      %s20 = int_to_ptr.vmem [resolvable:$true] %s19
      %22 = dma.hbm_to_vmem [thread:$0]  %s0, 64, %s20, [#allocation3]
    $region5: #{mlp2.1} parent=1 // pred_fallthru
      _
    // Predicated region
    $region6: #{mlp2.1} parent=1 // pred_check
      _
    $region7: #{mlp2.1} parent=1 // pred_check_branch
      %24 = sbr.rel (0) target = $region9
    $region8: #{mlp2.1} parent=1 // pred_region
      %s26 = ssub.s32 512, 512
      %27 = vsyncadd [#allocation6], %s26
      %s28 = sshll.u32 [#allocation5], 4
      %s29 = int_to_ptr.vmem [resolvable:$true] %s28
      %34 = dma.hbm_to_vmem [thread:$0]  %s1, 512, %s29, [#allocation6], 128, 128, 8
    $region9: #{mlp2.1} parent=1 // pred_fallthru
      _
    // Predicated region
    $region10: #{mlp2.1} parent=1 // pred_check
      _
    $region11: #{mlp2.1} parent=1 // pred_check_branch
      %36 = sbr.rel (0) target = $region13
    $region12: #{mlp2.1} parent=1 // pred_region
      _
    $region13: #{mlp2.1} parent=1 // pred_fallthru
      _
    // Predicated region
    $region14: #{mlp2.1} parent=1 // pred_check
      _
    $region15: #{mlp2.1} parent=1 // pred_check_branch
      %38 = sbr.rel (0) target = $region17
    $region16: #{mlp2.1} parent=1 // pred_region
      %s40 = ssub.s32 512, 512
      %41 = vsyncadd [#allocation6], %s40
      %s42 = sshll.u32 [#allocation7], 4
      %s43 = int_to_ptr.vmem [resolvable:$true] %s42
      %48 = dma.hbm_to_vmem [thread:$0]  %s3, 512, %s43, [#allocation6], 128, 128, 8
    $region17: #{mlp2.1} parent=1 // pred_fallthru
      _
    // Predicated region
    $region18: #{mlp2.1} parent=1 // pred_check
      _
    $region19: #{mlp2.1} parent=1 // pred_check_branch
      %50 = sbr.rel (0) target = $region21
    $region20: #{mlp2.1} parent=1 // pred_region
      _
    $region21: #{mlp2.1} parent=1 // pred_fallthru
      _
    // Predicated region
    $region22: #{mlp2.1} parent=1 // pred_check
      _
    $region23: #{mlp2.1} parent=1 // pred_check_branch
      %52 = sbr.rel (0) target = $region25
    $region24: #{mlp2.1} parent=1 // pred_region
      %53 = dma.done [#allocation3], 64
    $region25: #{mlp2.1} parent=1 // pred_fallthru
      _
    // Predicated region
    $region26: #{mlp2.1} parent=1 // pred_check
      _
    $region27: #{mlp2.1} parent=1 // pred_check_branch
      %55 = sbr.rel (0) target = $region29
    $region28: #{mlp2.1} parent=1 // pred_region
      %56 = dma.done [#allocation6], 512
    $region29: #{mlp2.1} parent=1 // pred_fallthru
      _
    // Predicated region
    $region30: #{mlp2.1} parent=1 // pred_check
      _
    $region31: #{mlp2.1} parent=1 // pred_check_branch
      %58 = sbr.rel (0) target = $region33
    $region32: #{mlp2.1} parent=1 // pred_region
      %59 = dma.done [#allocation6], 512
    $region33: #{mlp2.1} parent=1 // pred_fallthru
      _
    %v60 = vld [vmem:[#allocation2] sm:$0x7]
    %v61 = vld [vmem:[#allocation5] sm:$0xff]
    %v62 = vld [vmem:[#allocation5 + $0x8] sm:$0xff]
    %v63 = vld [vmem:[#allocation5 + $0x10] sm:$0xff]
    %v64 = vld [vmem:[#allocation5 + $0x18] sm:$0xff]
    %v65 = vld [vmem:[%s2] sm:$0x1]
    %v66 = vld [vmem:[#allocation7] sm:$0xff]
    %v67 = vld [vmem:[#allocation7 + $0x8] sm:$0xff]
    %v68 = vld [vmem:[#allocation7 + $0x10] sm:$0xff]
    %v69 = vld [vmem:[#allocation7 + $0x18] sm:$0xff]
    %v70 = vld [vmem:[%s4] sm:$0x1]
    %v72 = vlaneseq
    %v73 = vshrl.u32 %v72, 7
    %v74 = vsub.s32 0, %v73
    %v75 = vrot.slane %v65, %v74
    %vm77 = vcmask 261120
    %v79 = vsel %vm77, %v60, 0
    %81 = vmatprep.subr.mxu0 0.0
    %82 = vmatpush1.msra.mxu0 %v61
    %83 = vmatprep.subr.mxu0 0.0
    %84 = vmatpush1.msra.mxu0 %v62
    %85 = vmatprep.subr.mxu0 0.0
    %86 = vmatpush1.msra.mxu0 %v63
    %87 = vmatprep.subr.mxu0 0.0
    %88 = vmatpush1.msra.mxu0 %v64
    %89 = vmatprep.subr.mxu0 0.0
    %90 = vmatpush1.msra.mxu0 0.0
    %91 = vmatprep.subr.mxu0 0.0
    %92 = vmatpush1.msra.mxu0 0.0
    %93 = vmatprep.subr.mxu0 0.0
    %94 = vmatpush1.msra.mxu0 0.0
    %95 = vmatprep.subr.mxu0 0.0
    %96 = vmatpush1.msra.mxu0 0.0
    %97 = vmatprep.subr.mxu0 0.0
    %98 = vmatpush1.msra.mxu0 0.0
    %99 = vmatprep.subr.mxu0 0.0
    %100 = vmatpush1.msra.mxu0 0.0
    %101 = vmatprep.subr.mxu0 0.0
    %102 = vmatpush1.msra.mxu0 0.0
    %103 = vmatprep.subr.mxu0 0.0
    %104 = vmatpush1.msra.mxu0 0.0
    %105 = vmatprep.subr.mxu0 0.0
    %106 = vmatpush1.msra.mxu0 0.0
    %107 = vmatprep.subr.mxu0 0.0
    %108 = vmatpush1.msra.mxu0 0.0
    %109 = vmatprep.subr.mxu0 0.0
    %110 = vmatpush1.msra.mxu0 0.0
    %111 = vmatprep.subr.mxu0 0.0
    %112 = vmatpush1.msra.mxu0 0.0
    %113 = vmatprep.subr.mxu0 0.0
    %114 = vmatpush1.msra.mxu0 0.0
    %115 = vmatprep.subr.mxu0 0.0
    %116 = vmatpush1.msra.mxu0 0.0
    %117 = vmatprep.subr.mxu0 0.0
    %118 = vmatpush1.msra.mxu0 0.0
    %119 = vmatprep.subr.mxu0 0.0
    %120 = vmatpush1.msra.mxu0 0.0
    %121 = vmatprep.subr.mxu0 0.0
    %122 = vmatpush1.msra.mxu0 0.0
    %123 = vmatprep.subr.mxu0 0.0
    %124 = vmatpush1.msra.mxu0 0.0
    %125 = vmatprep.subr.mxu0 0.0
    %126 = vmatpush1.msra.mxu0 0.0
    %127 = vmatprep.subr.mxu0 0.0
    %128 = vmatpush1.msra.mxu0 0.0
    %129 = vmatprep.subr.mxu0 0.0
    %130 = vmatpush1.msra.mxu0 0.0
    %131 = vmatprep.subr.mxu0 0.0
    %132 = vmatpush1.msra.mxu0 0.0
    %133 = vmatprep.subr.mxu0 0.0
    %134 = vmatpush1.msra.mxu0 0.0
    %135 = vmatprep.subr.mxu0 0.0
    %136 = vmatpush1.msra.mxu0 0.0
    %137 = vmatprep.subr.mxu0 0.0
    %138 = vmatpush1.msra.mxu0 0.0
    %139 = vmatprep.subr.mxu0 0.0
    %140 = vmatpush1.msra.mxu0 0.0
    %141 = vmatprep.subr.mxu0 0.0
    %142 = vmatpush1.msra.mxu0 0.0
    %143 = vmatprep.subr.mxu0 0.0
    %144 = vmatpush1.msra.mxu0 0.0
    %145 = vmatprep.mubr.f32.mxu0 0.0
    %146 = vmatmul.mubr.f32.gmra.mrb[0].mxu0 %v79
    %v147 = vpop.f32.mrb[0].mxu0
    %v148 = vadd.f32 %v75, %v147
    %v149 = vpop.f32.mrb[0].mxu0
    %150 = vdwg.mxu0
    %v151 = vtanh.pop %v148
    %v153 = vlaneseq
    %v154 = vshrl.u32 %v153, 7
    %v155 = vsub.s32 0, %v154
    %v156 = vrot.slane %v70, %v155
    %v159 = vsel %vm77, %v151, 0
    %161 = vmatprep.subr.mxu0 0.0
    %162 = vmatpush1.msra.mxu0 %v66
    %163 = vmatprep.subr.mxu0 0.0
    %164 = vmatpush1.msra.mxu0 %v67
    %165 = vmatprep.subr.mxu0 0.0
    %166 = vmatpush1.msra.mxu0 %v68
    %167 = vmatprep.subr.mxu0 0.0
    %168 = vmatpush1.msra.mxu0 %v69
    %169 = vmatprep.subr.mxu0 0.0
    %170 = vmatpush1.msra.mxu0 0.0
    %171 = vmatprep.subr.mxu0 0.0
    %172 = vmatpush1.msra.mxu0 0.0
    %173 = vmatprep.subr.mxu0 0.0
    %174 = vmatpush1.msra.mxu0 0.0
    %175 = vmatprep.subr.mxu0 0.0
    %176 = vmatpush1.msra.mxu0 0.0
    %177 = vmatprep.subr.mxu0 0.0
    %178 = vmatpush1.msra.mxu0 0.0
    %179 = vmatprep.subr.mxu0 0.0
    %180 = vmatpush1.msra.mxu0 0.0
    %181 = vmatprep.subr.mxu0 0.0
    %182 = vmatpush1.msra.mxu0 0.0
    %183 = vmatprep.subr.mxu0 0.0
    %184 = vmatpush1.msra.mxu0 0.0
    %185 = vmatprep.subr.mxu0 0.0
    %186 = vmatpush1.msra.mxu0 0.0
    %187 = vmatprep.subr.mxu0 0.0
    %188 = vmatpush1.msra.mxu0 0.0
    %189 = vmatprep.subr.mxu0 0.0
    %190 = vmatpush1.msra.mxu0 0.0
    %191 = vmatprep.subr.mxu0 0.0
    %192 = vmatpush1.msra.mxu0 0.0
    %193 = vmatprep.subr.mxu0 0.0
    %194 = vmatpush1.msra.mxu0 0.0
    %195 = vmatprep.subr.mxu0 0.0
    %196 = vmatpush1.msra.mxu0 0.0
    %197 = vmatprep.subr.mxu0 0.0
    %198 = vmatpush1.msra.mxu0 0.0
    %199 = vmatprep.subr.mxu0 0.0
    %200 = vmatpush1.msra.mxu0 0.0
    %201 = vmatprep.subr.mxu0 0.0
    %202 = vmatpush1.msra.mxu0 0.0
    %203 = vmatprep.subr.mxu0 0.0
    %204 = vmatpush1.msra.mxu0 0.0
    %205 = vmatprep.subr.mxu0 0.0
    %206 = vmatpush1.msra.mxu0 0.0
    %207 = vmatprep.subr.mxu0 0.0
    %208 = vmatpush1.msra.mxu0 0.0
    %209 = vmatprep.subr.mxu0 0.0
    %210 = vmatpush1.msra.mxu0 0.0
    %211 = vmatprep.subr.mxu0 0.0
    %212 = vmatpush1.msra.mxu0 0.0
    %213 = vmatprep.subr.mxu0 0.0
    %214 = vmatpush1.msra.mxu0 0.0
    %215 = vmatprep.subr.mxu0 0.0
    %216 = vmatpush1.msra.mxu0 0.0
    %217 = vmatprep.subr.mxu0 0.0
    %218 = vmatpush1.msra.mxu0 0.0
    %219 = vmatprep.subr.mxu0 0.0
    %220 = vmatpush1.msra.mxu0 0.0
    %221 = vmatprep.subr.mxu0 0.0
    %222 = vmatpush1.msra.mxu0 0.0
    %223 = vmatprep.subr.mxu0 0.0
    %224 = vmatpush1.msra.mxu0 0.0
    %225 = vmatprep.mubr.f32.mxu0 0.0
    %226 = vmatmul.mubr.f32.gmra.mrb[0].mxu0 %v159
    %v227 = vpop.f32.mrb[0].mxu0
    %v228 = vadd.f32 %v156, %v227
    %v229 = vpop.f32.mrb[0].mxu0
    %230 = vdwg.mxu0
    %vm231 = vcmask 256000
    %232 = vst.msk [vmem:[#allocation8] sm:$0x7] %vm231, %v228
    // Predicated region
    $region34: #{mlp2.1} parent=1 // pred_check
      _
    $region35: #{mlp2.1} parent=1 // pred_check_branch
      %234 = sbr.rel (0) target = $region37
    $region36: #{mlp2.1} parent=1 // pred_region
      %s236 = ssub.s32 64, 64
      %237 = vsyncadd [#allocation4], %s236
      %s239 = sshll.u32 [#allocation8], 4
      %s240 = int_to_ptr.vmem [resolvable:$true] %s239
      %242 = dma.vmem_to_hbm [thread:$0]  %s240, 64, %s5, [#allocation4]
    $region37: #{mlp2.1} parent=1 // pred_fallthru
      _
    // Predicated region
    $region38: #{mlp2.1} parent=1 // pred_check
      _
    $region39: #{mlp2.1} parent=1 // pred_check_branch
      %244 = sbr.rel (0) target = $region41
    $region40: #{mlp2.1} parent=1 // pred_region
      %245 = dma.done [#allocation4], 64
    $region41: #{mlp2.1} parent=1 // pred_fallthru
      _
    %246 = vsyncpa [#allocation3], 1
    %247 = vsyncpa [#allocation6], 1
    %248 = vsyncpa [#allocation4], 1

</llo_original>
